<compile_context>
chip_gen: v7x
topology: tpu7x:2x2x1
jax: 0.10.0
libtpu: 0.0.40
codegen_flags: <defaults>
</compile_context>

<pallas_src>
import jax
import jax.numpy as jnp
from jax import lax
from jax.experimental import pallas as pl
from jax.experimental.pallas import tpu as pltpu

NUM_HEAD_CH = 84          # 4 box coords + 80 class scores
NUM_CLASSES = NUM_HEAD_CH - 4


def _fastsam_kernel(x_ref, wsc_ref, wbox_ref, bsc_ref, bbox_ref,
                    boxes_ref, scores_ref):
    # x_ref:      (1, C, tn)   features, channels on sublanes / anchors on lanes
    # wsc_ref:    (C, 80)      class-score head weight
    # wbox_ref:   (C, 4)       box head weight
    # bsc_ref:    (1, 80)      class-score bias (row)
    # bbox_ref:   (4, 1)       box bias (column)
    # boxes_ref:  (1, 4, tn)   decoded xyxy boxes, lane-dense (anchors on lanes)
    # scores_ref: (1, tn, 80)  class scores (anchors on sublanes)
    x = x_ref[0]                                        # [C, tn]

    # Class scores: contract over C with transposed LHS -> [tn, 80] on the MXU.
    scores = lax.dot_general(
        x, wsc_ref[...],
        dimension_numbers=(((0,), (0,)), ((), ())),
        preferred_element_type=jnp.float32,
    ) + bsc_ref[...]                                    # [tn, 80]

    # Box head kept lane-dense: [4, tn] = w_box^T @ x, bias broadcast over lanes.
    head = lax.dot_general(
        wbox_ref[...], x,
        dimension_numbers=(((0,), (0,)), ((), ())),
        preferred_element_type=jnp.float32,
    ) + bbox_ref[...]                                   # [4, tn]

    # xywh (center) -> xyxy (corners): two width-2 sublane slices, one concat.
    xy = head[0:2, :]                                   # [2, tn]
    half_wh = head[2:4, :] * 0.5                        # [2, tn]
    boxes = jnp.concatenate([xy - half_wh, xy + half_wh], axis=0)   # [4, tn]

    boxes_ref[0] = boxes.astype(boxes_ref.dtype)
    scores_ref[0] = scores.astype(scores_ref.dtype)


def _pick_tile_n(n, max_tile=2048):
    """Largest friendly anchor tile: full N if it fits, else a 128-multiple."""
    if n <= max_tile:
        return n                       # single block along anchors (always legal)
    cap = max_tile - (max_tile % 128)
    for t in range(cap, 127, -128):    # prefer a tile that divides N exactly
        if n % t == 0:
            return t
    return cap                         # padded tail block handled by Pallas


def fastsam_add_nms(x_nchw, weight, bias, *, tile_n=None, out_dtype=jnp.float32):
    """x_nchw: [B, C, H, W]; weight: [84, C]; bias: [84].

    Returns (bboxes [B, N, 1, 4], scores [B, N, 80]) with N = H*W.
    out_dtype=jnp.bfloat16 halves the dominant HBM write stream if downstream
    NMS tolerates reduced precision.
    """
    B, C, H, W = x_nchw.shape
    N = H * W
    if tile_n is None:
        tile_n = _pick_tile_n(N)

    # Glue (all free / tiny): NCHW -> [B, C, N] is a reshape (no transpose);
    # split the 84-channel head into its score / box parts once, wrapper-side.
    x_bcn = x_nchw.reshape(B, C, N)
    w_sc = jnp.transpose(weight[4:], (1, 0))            # [C, 80]
    w_box = jnp.transpose(weight[:4], (1, 0))           # [C, 4]
    b_sc = bias[4:].reshape(1, NUM_CLASSES)              # [1, 80]
    b_box = bias[:4].reshape(4, 1)                       # [4, 1]

    grid = (B, pl.cdiv(N, tile_n))

    boxes_raw, scores = pl.pallas_call(
        _fastsam_kernel,
        out_shape=(
            jax.ShapeDtypeStruct((B, 4, N), out_dtype),           # lane-dense boxes
            jax.ShapeDtypeStruct((B, N, NUM_CLASSES), out_dtype),
        ),
        grid_spec=pltpu.PrefetchScalarGridSpec(
            num_scalar_prefetch=0,
            grid=grid,
            in_specs=[
                pl.BlockSpec((1, C, tile_n), lambda b, n: (b, 0, n)),
                pl.BlockSpec((C, NUM_CLASSES), lambda b, n: (0, 0)),
                pl.BlockSpec((C, 4), lambda b, n: (0, 0)),
                pl.BlockSpec((1, NUM_CLASSES), lambda b, n: (0, 0)),
                pl.BlockSpec((4, 1), lambda b, n: (0, 0)),
            ],
            out_specs=[
                pl.BlockSpec((1, 4, tile_n), lambda b, n: (b, 0, n)),
                pl.BlockSpec((1, tile_n, NUM_CLASSES), lambda b, n: (b, n, 0)),
            ],
        ),
        compiler_params=pltpu.CompilerParams(
            dimension_semantics=("parallel", "parallel"),
        ),
    )(x_bcn, w_sc, w_box, b_sc, b_box)

    # Cheap 4-channel shuffle outside the kernel: [B,4,N] -> [B,N,1,4]
    # (torch: permute + unsqueeze(2)).
    bboxes = jnp.transpose(boxes_raw, (0, 2, 1))[:, :, None, :]
    return bboxes, scores


def _reference(x_nchw, weight, bias):
    """Pure-JAX reference reproducing the PyTorch forward semantics."""
    B, C, H, W = x_nchw.shape
    N = H * W
    # model(input): 1x1 conv -> [B, 84, N]
    x_flat = x_nchw.reshape(B, C, N)                      # [B, C, N]
    head = jnp.einsum("oc,bcn->bon", weight, x_flat) + bias[None, :, None]
    out = jnp.transpose(head, (0, 2, 1))                  # permute(0, 2, 1)
    bx, by, bw, bh = (out[..., 0:1], out[..., 1:2], out[..., 2:3], out[..., 3:4])
    x1, y1 = bx - bw / 2, by - bh / 2
    x2, y2 = bx + bw / 2, by + bh / 2
    bboxes = jnp.concatenate([x1, y1, x2, y2], axis=-1)[:, :, None, :]
    scores = out[..., 4:]
    return bboxes, scores


if __name__ == "__main__":
    key = jax.random.PRNGKey(0)
    k_x, k_w, k_b = jax.random.split(key, 3)

    B, C, H, W = 2, 4, 16, 16
    x = jax.random.normal(k_x, (B, C, H, W), dtype=jnp.float32)

    # Deterministic synthetic "model" parameters (1x1 conv head, 84 out chans).
    weight = jax.random.normal(k_w, (NUM_HEAD_CH, C), dtype=jnp.float32) * 0.1
    bias = jax.random.normal(k_b, (NUM_HEAD_CH,), dtype=jnp.float32) * 0.1

    bboxes, scores = jax.block_until_ready(fastsam_add_nms(x, weight, bias))

    ref_bboxes, ref_scores = _reference(x, weight, bias)
    assert bboxes.shape == (B, H * W, 1, 4), bboxes.shape
    assert scores.shape == (B, H * W, NUM_CLASSES), scores.shape
    assert jnp.allclose(bboxes, ref_bboxes, atol=1e-4, rtol=1e-4)
    assert jnp.allclose(scores, ref_scores, atol=1e-4, rtol=1e-4)

    # TODO(synk): the PyTorch module's debug prints and `exit(1)` dead code are
    # intentionally not reproduced.
    print("KERNEL_OK")
</pallas_src>

<mosaic_0001>
module attributes {stable_mosaic.version = 11 : i64} {
  func.func @_fastsam_kernel(%arg0: i32, %arg1: i32, %arg2: memref<1x4x256xf32, #tpu.memory_space<vmem>>, %arg3: memref<4x80xf32, #tpu.memory_space<vmem>>, %arg4: memref<4x4xf32, #tpu.memory_space<vmem>>, %arg5: memref<1x80xf32, #tpu.memory_space<vmem>>, %arg6: memref<4x1xf32, #tpu.memory_space<vmem>>, %arg7: memref<1x4x256xf32, #tpu.memory_space<vmem>>, %arg8: memref<1x256x80xf32, #tpu.memory_space<vmem>>) attributes {dimension_semantics = [#tpu.dimension_semantics<parallel>, #tpu.dimension_semantics<parallel>], iteration_bounds = array<i64: 2, 1>, scalar_prefetch = 0 : i64, scratch_operands = 0 : i64, tpu.core_type = #tpu.core_type<tc>, window_params = [{transform_indices = @transform_0, window_bounds = array<i64: 1, 4, 256>}, {pipeline_mode = #tpu.pipeline_mode<synchronous>, transform_indices = @transform_1, window_bounds = array<i64: 4, 80>}, {pipeline_mode = #tpu.pipeline_mode<synchronous>, transform_indices = @transform_2, window_bounds = array<i64: 4, 4>}, {pipeline_mode = #tpu.pipeline_mode<synchronous>, transform_indices = @transform_3, window_bounds = array<i64: 1, 80>}, {pipeline_mode = #tpu.pipeline_mode<synchronous>, transform_indices = @transform_4, window_bounds = array<i64: 4, 1>}, {transform_indices = @transform_5, window_bounds = array<i64: 1, 4, 256>}, {transform_indices = @transform_6, window_bounds = array<i64: 1, 256, 80>}]} {
    %c0 = arith.constant 0 : index
    %c0_0 = arith.constant 0 : index
    %c0_1 = arith.constant 0 : index
    %0 = vector.load %arg2[%c0, %c0_0, %c0_1] : memref<1x4x256xf32, #tpu.memory_space<vmem>>, vector<1x4x256xf32>
    %1 = vector.shape_cast %0 : vector<1x4x256xf32> to vector<4x256xf32>
    %c0_2 = arith.constant 0 : index
    %c0_3 = arith.constant 0 : index
    %2 = vector.load %arg3[%c0_2, %c0_3] : memref<4x80xf32, #tpu.memory_space<vmem>>, vector<4x80xf32>
    %cst = arith.constant dense<0.000000e+00> : vector<256x80xf32>
    %3 = tpu.matmul %1, %2, %cst {dimension_numbers = #tpu.dot_dimension_numbers<[0], [0], [1], [1], [0, 1, 1, 1], [], []>} : vector<4x256xf32>, vector<4x80xf32>, vector<256x80xf32> -> vector<256x80xf32>
    %c0_4 = arith.constant 0 : index
    %c0_5 = arith.constant 0 : index
    %4 = vector.load %arg5[%c0_4, %c0_5] : memref<1x80xf32, #tpu.memory_space<vmem>>, vector<1x80xf32>
    %5 = vector.broadcast %4 : vector<1x80xf32> to vector<256x80xf32>
    %6 = arith.addf %3, %5 : vector<256x80xf32>
    %c0_6 = arith.constant 0 : index
    %c0_7 = arith.constant 0 : index
    %7 = vector.load %arg4[%c0_6, %c0_7] : memref<4x4xf32, #tpu.memory_space<vmem>>, vector<4x4xf32>
    %cst_8 = arith.constant dense<0.000000e+00> : vector<4x256xf32>
    %8 = tpu.matmul %7, %1, %cst_8 {dimension_numbers = #tpu.dot_dimension_numbers<[0], [0], [1], [1], [0, 1, 1, 1], [], []>} : vector<4x4xf32>, vector<4x256xf32>, vector<4x256xf32> -> vector<4x256xf32>
    %c0_9 = arith.constant 0 : index
    %c0_10 = arith.constant 0 : index
    %9 = vector.load %arg6[%c0_9, %c0_10] : memref<4x1xf32, #tpu.memory_space<vmem>>, vector<4x1xf32>
    %10 = vector.broadcast %9 : vector<4x1xf32> to vector<4x256xf32>
    %11 = arith.addf %8, %10 : vector<4x256xf32>
    %12 = vector.extract_strided_slice %11 {offsets = [0, 0], sizes = [2, 256], strides = [1, 1]} : vector<4x256xf32> to vector<2x256xf32>
    %13 = vector.extract_strided_slice %11 {offsets = [2, 0], sizes = [2, 256], strides = [1, 1]} : vector<4x256xf32> to vector<2x256xf32>
    %cst_11 = arith.constant 5.000000e-01 : f32
    %14 = vector.broadcast %cst_11 : f32 to vector<2x256xf32>
    %15 = arith.mulf %13, %14 : vector<2x256xf32>
    %16 = arith.subf %12, %15 : vector<2x256xf32>
    %17 = arith.addf %12, %15 : vector<2x256xf32>
    %18 = tpu.concatenate %16, %17 in 0 : vector<2x256xf32>, vector<2x256xf32> -> vector<4x256xf32>
    %c0_12 = arith.constant 0 : index
    %c0_13 = arith.constant 0 : index
    %c0_14 = arith.constant 0 : index
    %19 = vector.load %arg7[%c0_12, %c0_13, %c0_14] : memref<1x4x256xf32, #tpu.memory_space<vmem>>, vector<1x4x256xf32>
    %20 = vector.shape_cast %19 : vector<1x4x256xf32> to vector<4x256xf32>
    %21 = vector.shape_cast %18 : vector<4x256xf32> to vector<1x4x256xf32>
    tpu.vector_store %arg7[%c0_12, %c0_13, %c0_14], %21 {strides = array<i32>} : memref<1x4x256xf32, #tpu.memory_space<vmem>>, vector<1x4x256xf32>,
    %c0_15 = arith.constant 0 : index
    %c0_16 = arith.constant 0 : index
    %c0_17 = arith.constant 0 : index
    %22 = vector.load %arg8[%c0_15, %c0_16, %c0_17] : memref<1x256x80xf32, #tpu.memory_space<vmem>>, vector<1x256x80xf32>
    %23 = vector.shape_cast %22 : vector<1x256x80xf32> to vector<256x80xf32>
    %24 = vector.shape_cast %6 : vector<256x80xf32> to vector<1x256x80xf32>
    tpu.vector_store %arg8[%c0_15, %c0_16, %c0_17], %24 {strides = array<i32>} : memref<1x256x80xf32, #tpu.memory_space<vmem>>, vector<1x256x80xf32>,
    return
  }
  func.func @transform_0(%arg0: i32, %arg1: i32) -> (i32, i32, i32) {
    %c0_i32 = arith.constant 0 : i32
    %c0_i32_0 = arith.constant 0 : i32
    return %arg0, %c0_i32, %arg1 : i32, i32, i32
  }
  func.func @transform_1(%arg0: i32, %arg1: i32) -> (i32, i32) {
    %c0_i32 = arith.constant 0 : i32
    %c0_i32_0 = arith.constant 0 : i32
    %c0_i32_1 = arith.constant 0 : i32
    return %c0_i32, %c0_i32_0 : i32, i32
  }
  func.func @transform_2(%arg0: i32, %arg1: i32) -> (i32, i32) {
    %c0_i32 = arith.constant 0 : i32
    %c0_i32_0 = arith.constant 0 : i32
    %c0_i32_1 = arith.constant 0 : i32
    return %c0_i32, %c0_i32_0 : i32, i32
  }
  func.func @transform_3(%arg0: i32, %arg1: i32) -> (i32, i32) {
    %c0_i32 = arith.constant 0 : i32
    %c0_i32_0 = arith.constant 0 : i32
    %c0_i32_1 = arith.constant 0 : i32
    return %c0_i32, %c0_i32_0 : i32, i32
  }
  func.func @transform_4(%arg0: i32, %arg1: i32) -> (i32, i32) {
    %c0_i32 = arith.constant 0 : i32
    %c0_i32_0 = arith.constant 0 : i32
    %c0_i32_1 = arith.constant 0 : i32
    return %c0_i32, %c0_i32_0 : i32, i32
  }
  func.func @transform_5(%arg0: i32, %arg1: i32) -> (i32, i32, i32) {
    %c0_i32 = arith.constant 0 : i32
    %c0_i32_0 = arith.constant 0 : i32
    return %arg0, %c0_i32, %arg1 : i32, i32, i32
  }
  func.func @transform_6(%arg0: i32, %arg1: i32) -> (i32, i32, i32) {
    %c0_i32 = arith.constant 0 : i32
    %c0_i32_0 = arith.constant 0 : i32
    return %arg0, %arg1, %c0_i32 : i32, i32, i32
  }
}

</mosaic_0001>

<llo_original>
// kernel: tpu_custom_call.1
$region0: #{tpu_custom_call.1}
  #allocation0 [shape = 'u32[]', space=smem, size = 0x4, offset = 0x4, fixed_abs, tag = 'smem constant byte address 0x4 - core index']
  #allocation1 [shape = 'u32[144,128]{1,0:T(1,128)}', space=vmem, size = 0x12000, scoped, tag = 'internal scratch']
  %s0 = inlined_call_operand.hbm [shape: f32[2,4,256], index: 0, kind: input, shape index: {}]
  %s1 = inlined_call_operand.vmem [shape: f32[4,80], index: 1, kind: input, shape index: {}]
  %s2 = inlined_call_operand.vmem [shape: f32[4,4], index: 2, kind: input, shape index: {}]
  %s3 = inlined_call_operand.vmem [shape: f32[1,80], index: 3, kind: input, shape index: {}]
  %s4 = inlined_call_operand.vmem [shape: f32[4,1], index: 4, kind: input, shape index: {}]
  %s5 = inlined_call_operand.hbm [shape: f32[2,4,256], index: 5, kind: output, shape index: {0}]
  %s6 = inlined_call_operand.vmem [shape: f32[2,256,80], index: 6, kind: output, shape index: {1}]
  %7 = xla_tuple %s5, %s6
  %s8 = sld [smem:[#allocation0]]
  $region65: #{tpu_custom_call.1} parent=0
    _
  %s10 = ssub.s32 1, %s8
  %s11 = scalar_select 0, %s10, %s8
  $region1: #{tpu_custom_call.1} parent=0
    #allocation2 [shape = 'u8[8192]{0}', space=vmem, size = 0x2000, scoped, tag = 'input window, operand 0']
    #allocation3 [shape = 's32[2]{0}', space=sflag, size = 0x8, scoped, tag = 'scoped memory for tpu_custom_call.1']
    #allocation4 [shape = 's32[2]{0}', space=sflag, size = 0x8, scoped, tag = 'scoped memory for tpu_custom_call.1']
    #allocation5 [shape = 'u8[8192]{0}', space=vmem, size = 0x2000, scoped, tag = 'output window, operand 0']
    %12 = vsyncpa [#allocation3], 0
    %s13 = scalar_lea.sflag [#allocation3], 1
    %14 = vsyncpa %s13, 0
    %15 = vsyncpa [#allocation4], 0
    %s16 = scalar_lea.sflag [#allocation4], 1
    %17 = vsyncpa %s16, 0
    loop: start=0, step=1, limit=4
    $region2: #{tpu_custom_call.1} parent=1 // loop_pre_header
      _
    $region3: #{tpu_custom_call.1} parent=1 // loop_header
      %s19 = sphi 0, %s23
      %p20 = scmp.ge.s32.totalorder %s19, 4
      %s26 = sphi 0, %s38
      %s27 = sphi 0, %s34
      %s28 = sphi 0, %s26
      %s29 = sphi 0, %s27
      %s30 = sphi 0, %s28
      %s31 = sphi 0, %s29
      %s43 = sphi 0, %s45
      %s46 = sphi 0, %s43
      %s47 = sphi 0, %s46
      %s63 = sphi 0, %s47
      %s67 = sphi 0, %s67
      %s69 = sphi 0, %s67
      %s70 = sphi 0, %s69
      %s84 = sphi 0, %s70
      %s88 = sphi 0, %s88
      %s90 = sphi 0, %s88
      %s91 = sphi 0, %s90
      %s105 = sphi 0, %s91
      %s109 = sphi 0, %s109
      %s111 = sphi 0, %s109
      %s112 = sphi 0, %s111
      %s126 = sphi 0, %s112
      %s130 = sphi 0, %s130
      %s132 = sphi 0, %s130
      %s133 = sphi 0, %s132
      %s147 = sphi 0, %s133
      %s155 = sphi 0, %s157
      %s158 = sphi 0, %s155
      %s159 = sphi 0, %s158
      %s175 = sphi 0, %s159
      %s183 = sphi 0, %s185
      %s186 = sphi 0, %s183
      %s187 = sphi 0, %s186
      %s203 = sphi 0, %s187
    $region4: #{tpu_custom_call.1} parent=1 // loop_header_branch
      %22 = sbr.rel (%p20) target = $region8
    $region5: #{tpu_custom_call.1} parent=1 // loop_body
      %s24 = ssub.s32 %s19, 1
      %s25 = ssub.s32 %s19, 2
      %s32 = sadd.s32 1, %s27
      %p33 = scmp.ge.s32.totalorder %s32, 1
      %s34 = scalar_select %p33, 0, %s32
      %s35 = sadd.s32 1, %s26
      %s36 = scalar_select %p33, %s35, %s26
      %p37 = scmp.ge.s32.totalorder %s36, 2
      %s38 = scalar_select %p37, 0, %s36
      %s39 = ssub.s32 %s26, %s38
      %s40 = ssub.s32 %s27, %s34
      %s41 = sor.u32 %s39, %s40
      %p42 = scmp.eq.s32.totalorder %s41, 0
      %s44 = sadd.s32 %s43, 1
      %s45 = scalar_select %p42, %s43, %s44
      %p48 = pneg %p42
      %p49 = scmp.eq.s32.totalorder %s19, 1
      %p50 = por %p48, %p49
      %p51 = scmp.ne.s32.totalorder %s43, %s46
      %p52 = scmp.eq.s32.totalorder %s19, 0
      %p53 = por %p51, %p52
      %p54 = scmp.ne.s32.totalorder %s43, %s46
      %p55 = scmp.eq.s32.totalorder %s24, 1
      %p56 = por %p54, %p55
      %p57 = scmp.ne.s32.totalorder %s46, %s47
      %p58 = scmp.eq.s32.totalorder %s24, 0
      %p59 = por %p57, %p58
      %p60 = scmp.ne.s32.totalorder %s46, %s47
      %p61 = scmp.eq.s32.totalorder %s25, 1
      %p62 = por %p60, %p61
      %p64 = scmp.ne.s32.totalorder %s47, %s63
      %p65 = scmp.eq.s32.totalorder %s25, 0
      %p66 = por %p64, %p65
      %s68 = sadd.s32 %s67, 1
      %p71 = scmp.eq.s32.totalorder %s19, 1
      %p72 = scmp.ne.s32.totalorder %s67, %s69
      %p73 = scmp.eq.s32.totalorder %s19, 0
      %p74 = por %p72, %p73
      %p75 = scmp.ne.s32.totalorder %s67, %s69
      %p76 = scmp.eq.s32.totalorder %s24, 1
      %p77 = por %p75, %p76
      %p78 = scmp.ne.s32.totalorder %s69, %s70
      %p79 = scmp.eq.s32.totalorder %s24, 0
      %p80 = por %p78, %p79
      %p81 = scmp.ne.s32.totalorder %s69, %s70
      %p82 = scmp.eq.s32.totalorder %s25, 1
      %p83 = por %p81, %p82
      %p85 = scmp.ne.s32.totalorder %s70, %s84
      %p86 = scmp.eq.s32.totalorder %s25, 0
      %p87 = por %p85, %p86
      %s89 = sadd.s32 %s88, 1
      %p92 = scmp.eq.s32.totalorder %s19, 1
      %p93 = scmp.ne.s32.totalorder %s88, %s90
      %p94 = scmp.eq.s32.totalorder %s19, 0
      %p95 = por %p93, %p94
      %p96 = scmp.ne.s32.totalorder %s88, %s90
      %p97 = scmp.eq.s32.totalorder %s24, 1
      %p98 = por %p96, %p97
      %p99 = scmp.ne.s32.totalorder %s90, %s91
      %p100 = scmp.eq.s32.totalorder %s24, 0
      %p101 = por %p99, %p100
      %p102 = scmp.ne.s32.totalorder %s90, %s91
      %p103 = scmp.eq.s32.totalorder %s25, 1
      %p104 = por %p102, %p103
      %p106 = scmp.ne.s32.totalorder %s91, %s105
      %p107 = scmp.eq.s32.totalorder %s25, 0
      %p108 = por %p106, %p107
      %s110 = sadd.s32 %s109, 1
      %p113 = scmp.eq.s32.totalorder %s19, 1
      %p114 = scmp.ne.s32.totalorder %s109, %s111
      %p115 = scmp.eq.s32.totalorder %s19, 0
      %p116 = por %p114, %p115
      %p117 = scmp.ne.s32.totalorder %s109, %s111
      %p118 = scmp.eq.s32.totalorder %s24, 1
      %p119 = por %p117, %p118
      %p120 = scmp.ne.s32.totalorder %s111, %s112
      %p121 = scmp.eq.s32.totalorder %s24, 0
      %p122 = por %p120, %p121
      %p123 = scmp.ne.s32.totalorder %s111, %s112
      %p124 = scmp.eq.s32.totalorder %s25, 1
      %p125 = por %p123, %p124
      %p127 = scmp.ne.s32.totalorder %s112, %s126
      %p128 = scmp.eq.s32.totalorder %s25, 0
      %p129 = por %p127, %p128
      %s131 = sadd.s32 %s130, 1
      %p134 = scmp.eq.s32.totalorder %s19, 1
      %p135 = scmp.ne.s32.totalorder %s130, %s132
      %p136 = scmp.eq.s32.totalorder %s19, 0
      %p137 = por %p135, %p136
      %p138 = scmp.ne.s32.totalorder %s130, %s132
      %p139 = scmp.eq.s32.totalorder %s24, 1
      %p140 = por %p138, %p139
      %p141 = scmp.ne.s32.totalorder %s132, %s133
      %p142 = scmp.eq.s32.totalorder %s24, 0
      %p143 = por %p141, %p142
      %p144 = scmp.ne.s32.totalorder %s132, %s133
      %p145 = scmp.eq.s32.totalorder %s25, 1
      %p146 = por %p144, %p145
      %p148 = scmp.ne.s32.totalorder %s133, %s147
      %p149 = scmp.eq.s32.totalorder %s25, 0
      %p150 = por %p148, %p149
      %s151 = ssub.s32 %s26, %s38
      %s152 = ssub.s32 %s27, %s34
      %s153 = sor.u32 %s151, %s152
      %p154 = scmp.eq.s32.totalorder %s153, 0
      %s156 = sadd.s32 %s155, 1
      %s157 = scalar_select %p154, %s155, %s156
      %p160 = pneg %p154
      %p161 = scmp.eq.s32.totalorder %s19, 1
      %p162 = por %p160, %p161
      %p163 = scmp.ne.s32.totalorder %s155, %s158
      %p164 = scmp.eq.s32.totalorder %s19, 0
      %p165 = por %p163, %p164
      %p166 = scmp.ne.s32.totalorder %s155, %s158
      %p167 = scmp.eq.s32.totalorder %s24, 1
      %p168 = por %p166, %p167
      %p169 = scmp.ne.s32.totalorder %s158, %s159
      %p170 = scmp.eq.s32.totalorder %s24, 0
      %p171 = por %p169, %p170
      %p172 = scmp.ne.s32.totalorder %s158, %s159
      %p173 = scmp.eq.s32.totalorder %s25, 1
      %p174 = por %p172, %p173
      %p176 = scmp.ne.s32.totalorder %s159, %s175
      %p177 = scmp.eq.s32.totalorder %s25, 0
      %p178 = por %p176, %p177
      %s179 = ssub.s32 %s26, %s38
      %s180 = ssub.s32 %s27, %s34
      %s181 = sor.u32 %s179, %s180
      %p182 = scmp.eq.s32.totalorder %s181, 0
      %s184 = sadd.s32 %s183, 1
      %s185 = scalar_select %p182, %s183, %s184
      %p188 = pneg %p182
      %p189 = scmp.eq.s32.totalorder %s19, 1
      %p190 = por %p188, %p189
      %p191 = scmp.ne.s32.totalorder %s183, %s186
      %p192 = scmp.eq.s32.totalorder %s19, 0
      %p193 = por %p191, %p192
      %p194 = scmp.ne.s32.totalorder %s183, %s186
      %p195 = scmp.eq.s32.totalorder %s24, 1
      %p196 = por %p194, %p195
      %p197 = scmp.ne.s32.totalorder %s186, %s187
      %p198 = scmp.eq.s32.totalorder %s24, 0
      %p199 = por %p197, %p198
      %p200 = scmp.ne.s32.totalorder %s186, %s187
      %p201 = scmp.eq.s32.totalorder %s25, 1
      %p202 = por %p200, %p201
      %p204 = scmp.ne.s32.totalorder %s187, %s203
      %p205 = scmp.eq.s32.totalorder %s25, 0
      %p206 = por %p204, %p205
      %p207 = scmp.le.s32.totalorder 1, %s19
      %p208 = scmp.lt.s32.totalorder %s19, 3
      %p209 = pnand %p207, %p208
      %p210 = pneg %p209
      // Predicated region
      $region9: #{tpu_custom_call.1} parent=5 // pred_check
        _
      $region10: #{tpu_custom_call.1} parent=5 // pred_check_branch
        %212 = sbr.rel (%p209) target = $region12
      $region11: #{tpu_custom_call.1} parent=5 // pred_region
        %s213 = ssub.s32 %s19, 1
        // Predicated region
        $region13: #{tpu_custom_call.1} parent=11 // pred_check
          %p214 = pneg %p80
        $region14: #{tpu_custom_call.1} parent=11 // pred_check_branch
          %216 = sbr.rel (%p214) target = $region16
        $region15: #{tpu_custom_call.1} parent=11 // pred_region
          _
        $region16: #{tpu_custom_call.1} parent=11 // pred_fallthru
          _
        // Predicated region
        $region17: #{tpu_custom_call.1} parent=11 // pred_check
          %p217 = pneg %p101
        $region18: #{tpu_custom_call.1} parent=11 // pred_check_branch
          %219 = sbr.rel (%p217) target = $region20
        $region19: #{tpu_custom_call.1} parent=11 // pred_region
          _
        $region20: #{tpu_custom_call.1} parent=11 // pred_fallthru
          _
        // Predicated region
        $region21: #{tpu_custom_call.1} parent=11 // pred_check
          %p220 = pneg %p122
        $region22: #{tpu_custom_call.1} parent=11 // pred_check_branch
          %222 = sbr.rel (%p220) target = $region24
        $region23: #{tpu_custom_call.1} parent=11 // pred_region
          _
        $region24: #{tpu_custom_call.1} parent=11 // pred_fallthru
          _
        // Predicated region
        $region25: #{tpu_custom_call.1} parent=11 // pred_check
          %p223 = pneg %p143
        $region26: #{tpu_custom_call.1} parent=11 // pred_check_branch
          %225 = sbr.rel (%p223) target = $region28
        $region27: #{tpu_custom_call.1} parent=11 // pred_region
          _
        $region28: #{tpu_custom_call.1} parent=11 // pred_fallthru
          _
      $region12: #{tpu_custom_call.1} parent=5 // pred_fallthru
        _
      %p226 = scmp.lt.s32.totalorder %s19, 2
      // Predicated region
      $region29: #{tpu_custom_call.1} parent=5 // pred_check
        %p227 = pneg %p226
      $region30: #{tpu_custom_call.1} parent=5 // pred_check_branch
        %229 = sbr.rel (%p227) target = $region32
      $region31: #{tpu_custom_call.1} parent=5 // pred_region
        // Predicated region
        $region33: #{tpu_custom_call.1} parent=31 // pred_check
          %p230 = pneg %p53
        $region34: #{tpu_custom_call.1} parent=31 // pred_check_branch
          %232 = sbr.rel (%p230) target = $region36
        $region35: #{tpu_custom_call.1} parent=31 // pred_region
          %s233 = sand.u32 %s43, 1
          %s234 = scalar_lea.sflag [#allocation3], %s233
          %s235 = sand.u32 %s43, 1
          %s236 = smul.addr %s235, 8
          %s237 = scalar_lea.vmem [#allocation2], %s236
          %s238 = smul.u32 2, %s27
          %s240 = ssub.s32 128, 128
          %241 = vsyncadd %s234, %s240
          %s242 = smul.addr %s26, 2
          %s243 = sadd.s32 %s238, %s242
          %s244 = smul.addr %s243, 64
          %s245 = scalar_lea.hbm %s0, %s244
          %s247 = sshll.u32 %s237, 4
          %s248 = int_to_ptr.vmem [resolvable:$true] %s247
          %250 = dma.hbm_to_vmem [thread:$0]  %s245, 128, %s248, %s234
        $region36: #{tpu_custom_call.1} parent=31 // pred_fallthru
          _
      $region32: #{tpu_custom_call.1} parent=5 // pred_fallthru
        _
      %p251 = scmp.le.s32.totalorder 1, %s19
      %p252 = scmp.lt.s32.totalorder %s19, 3
      %p253 = pnand %p251, %p252
      %p254 = pneg %p253
      // Predicated region
      $region37: #{tpu_custom_call.1} parent=5 // pred_check
        _
      $region38: #{tpu_custom_call.1} parent=5 // pred_check_branch
        %256 = sbr.rel (%p253) target = $region40
      $region39: #{tpu_custom_call.1} parent=5 // pred_region
        %s257 = ssub.s32 %s19, 1
        %s258 = sand.u32 %s46, 1
        %s259 = scalar_lea.sflag [#allocation3], %s258
        %s260 = sand.u32 %s46, 1
        %s261 = smul.addr %s260, 8
        %s262 = scalar_lea.vmem [#allocation2], %s261
        // Predicated region
        $region41: #{tpu_custom_call.1} parent=39 // pred_check
          %p263 = pneg %p59
        $region42: #{tpu_custom_call.1} parent=39 // pred_check_branch
          %265 = sbr.rel (%p263) target = $region44
        $region43: #{tpu_custom_call.1} parent=39 // pred_region
          %266 = dma.done %s259, 128
        $region44: #{tpu_custom_call.1} parent=39 // pred_fallthru
          _
        %s267 = sand.u32 %s46, 1
        %s268 = scalar_lea.sflag [#allocation3], %s267
        %s269 = sand.u32 %s46, 1
        %s270 = smul.addr %s269, 8
        %s271 = scalar_lea.vmem [#allocation2], %s270
        %p272 = pneg %p59
        %p273 = pneg %p56
        %p274 = pneg %p80
        %p275 = pneg %p77
        %p276 = pneg %p101
        %p277 = pneg %p98
        %p278 = pneg %p122
        %p279 = pneg %p119
        %p280 = pneg %p143
        %p281 = pneg %p140
        %p282 = pneg %p171
        %p283 = pneg %p168
        %s284 = sand.u32 %s158, 1
        %s285 = scalar_lea.sflag [#allocation4], %s284
        %s286 = sand.u32 %s158, 1
        %s287 = smul.addr %s286, 8
        %s288 = scalar_lea.vmem [#allocation5], %s287
        %p289 = pneg %p199
        %p290 = pneg %p196
        %s291 = smul.u32 32, %s29
        %p292 = scmp.lt.s32.totalorder %s28, 1
        %s293 = scalar_select %p292, %s28, 1
        %p294 = scmp.lt.s32.totalorder %s291, 31
        %s295 = scalar_select %p294, %s291, 31
        %s296 = smul.addr %s293, 32
        %s297 = sadd.s32 %s295, %s296
        %s298 = smul.addr %s297, 8
        %s299 = scalar_lea.vmem %s6, %s298
        %s300 = smul.u32 2, %s29
        %s301 = smul.u32 2, %s29
        %s302 = smul.u32 32, %s29
        %p303 = scmp.lt.s32.totalorder %s28, 1
        %s304 = scalar_select %p303, %s28, 1
        %p305 = scmp.lt.s32.totalorder %s302, 31
        %s306 = scalar_select %p305, %s302, 31
        %s307 = smul.addr %s304, 32
        %s308 = sadd.s32 %s306, %s307
        %s309 = smul.addr %s308, 8
        %s310 = scalar_lea.vmem %s6, %s309
        %s311 = smul.u32 32, %s29
        %v312 = vld [vmem:[%s262] sm:$0xff]
        %v313 = vld [vmem:[%s1] sm:$0xf]
        %v314 = vld [vmem:[%s3] sm:$0x1]
        %v316 = vlaneseq
        %v317 = vshrl.u32 %v316, 7
        %v318 = vsub.s32 0, %v317
        %v319 = vrot.slane %v314, %v318
        %v322 = vcombine.high %v312, %v312
        %324 = vxpose.xlu0.b32.start [1/16] %v312, 128
        %325 = vxpose.xlu0.b32.cont [2/16] 0.0, 128
        %326 = vxpose.xlu0.b32.cont [3/16] 0.0, 128
        %327 = vxpose.xlu0.b32.cont [4/16] 0.0, 128
        %328 = vxpose.xlu0.b32.cont [5/16] 0.0, 128
        %329 = vxpose.xlu0.b32.cont [6/16] 0.0, 128
        %330 = vxpose.xlu0.b32.cont [7/16] 0.0, 128
        %331 = vxpose.xlu0.b32.cont [8/16] 0.0, 128
        %332 = vxpose.xlu0.b32.cont [9/16] 0.0, 128
        %333 = vxpose.xlu0.b32.cont [10/16] 0.0, 128
        %334 = vxpose.xlu0.b32.cont [11/16] 0.0, 128
        %335 = vxpose.xlu0.b32.cont [12/16] 0.0, 128
        %336 = vxpose.xlu0.b32.cont [13/16] 0.0, 128
        %337 = vxpose.xlu0.b32.cont [14/16] 0.0, 128
        %338 = vxpose.xlu0.b32.cont [15/16] 0.0, 128
        %339 = vxpose.xlu0.b32.end [16/16] 0.0, 128
        %v340 = vpop.trf.xlu0
        %v341 = vpop.trf.xlu0
        %v342 = vpop.trf.xlu0
        %v343 = vpop.trf.xlu0
        %v344 = vpop.trf.xlu0
        %v345 = vpop.trf.xlu0
        %v346 = vpop.trf.xlu0
        %v347 = vpop.trf.xlu0
        %v348 = vpop.trf.xlu0
        %v349 = vpop.trf.xlu0
        %v350 = vpop.trf.xlu0
        %v351 = vpop.trf.xlu0
        %v352 = vpop.trf.xlu0
        %v353 = vpop.trf.xlu0
        %v354 = vpop.trf.xlu0
        %v355 = vpop.trf.xlu0
        %356 = vxpose.xlu0.b32.start [1/16] %v322, 128
        %357 = vxpose.xlu0.b32.cont [2/16] 0.0, 128
        %358 = vxpose.xlu0.b32.cont [3/16] 0.0, 128
        %359 = vxpose.xlu0.b32.cont [4/16] 0.0, 128
        %360 = vxpose.xlu0.b32.cont [5/16] 0.0, 128
        %361 = vxpose.xlu0.b32.cont [6/16] 0.0, 128
        %362 = vxpose.xlu0.b32.cont [7/16] 0.0, 128
        %363 = vxpose.xlu0.b32.cont [8/16] 0.0, 128
        %364 = vxpose.xlu0.b32.cont [9/16] 0.0, 128
        %365 = vxpose.xlu0.b32.cont [10/16] 0.0, 128
        %366 = vxpose.xlu0.b32.cont [11/16] 0.0, 128
        %367 = vxpose.xlu0.b32.cont [12/16] 0.0, 128
        %368 = vxpose.xlu0.b32.cont [13/16] 0.0, 128
        %369 = vxpose.xlu0.b32.cont [14/16] 0.0, 128
        %370 = vxpose.xlu0.b32.cont [15/16] 0.0, 128
        %371 = vxpose.xlu0.b32.end [16/16] 0.0, 128
        %v372 = vpop.trf.xlu0
        %v373 = vpop.trf.xlu0
        %v374 = vpop.trf.xlu0
        %v375 = vpop.trf.xlu0
        %v376 = vpop.trf.xlu0
        %v377 = vpop.trf.xlu0
        %v378 = vpop.trf.xlu0
        %v379 = vpop.trf.xlu0
        %v380 = vpop.trf.xlu0
        %v381 = vpop.trf.xlu0
        %v382 = vpop.trf.xlu0
        %v383 = vpop.trf.xlu0
        %v384 = vpop.trf.xlu0
        %v385 = vpop.trf.xlu0
        %v386 = vpop.trf.xlu0
        %v387 = vpop.trf.xlu0
        %vm388 = vcmask 31744
        %v390 = vsel %vm388, %v340, 0
        %v393 = vsel %vm388, %v341, 0
        %v396 = vsel %vm388, %v342, 0
        %v399 = vsel %vm388, %v343, 0
        %v402 = vsel %vm388, %v344, 0
        %v405 = vsel %vm388, %v345, 0
        %v408 = vsel %vm388, %v346, 0
        %v411 = vsel %vm388, %v347, 0
        %v414 = vsel %vm388, %v348, 0
        %v417 = vsel %vm388, %v349, 0
        %v420 = vsel %vm388, %v350, 0
        %v423 = vsel %vm388, %v351, 0
        %v426 = vsel %vm388, %v352, 0
        %v429 = vsel %vm388, %v353, 0
        %v432 = vsel %vm388, %v354, 0
        %v435 = vsel %vm388, %v355, 0
        %v438 = vsel %vm388, %v372, 0
        %v441 = vsel %vm388, %v373, 0
        %v444 = vsel %vm388, %v374, 0
        %v447 = vsel %vm388, %v375, 0
        %v450 = vsel %vm388, %v376, 0
        %v453 = vsel %vm388, %v377, 0
        %v456 = vsel %vm388, %v378, 0
        %v459 = vsel %vm388, %v379, 0
        %v462 = vsel %vm388, %v380, 0
        %v465 = vsel %vm388, %v381, 0
        %v468 = vsel %vm388, %v382, 0
        %v471 = vsel %vm388, %v383, 0
        %v474 = vsel %vm388, %v384, 0
        %v477 = vsel %vm388, %v385, 0
        %v480 = vsel %vm388, %v386, 0
        %v483 = vsel %vm388, %v387, 0
        %vm485 = vcmask 1043456
        %v487 = vsel %vm485, %v313, 0
        %489 = vmatprep.subr.mxu0 0.0
        %490 = vmatpush1.msra.mxu0 %v487
        %491 = vmatprep.subr.mxu0 0.0
        %492 = vmatpush1.msra.mxu0 0.0
        %493 = vmatprep.subr.mxu0 0.0
        %494 = vmatpush1.msra.mxu0 0.0
        %495 = vmatprep.subr.mxu0 0.0
        %496 = vmatpush1.msra.mxu0 0.0
        %497 = vmatprep.subr.mxu0 0.0
        %498 = vmatpush1.msra.mxu0 0.0
        %499 = vmatprep.subr.mxu0 0.0
        %500 = vmatpush1.msra.mxu0 0.0
        %501 = vmatprep.subr.mxu0 0.0
        %502 = vmatpush1.msra.mxu0 0.0
        %503 = vmatprep.subr.mxu0 0.0
        %504 = vmatpush1.msra.mxu0 0.0
        %505 = vmatprep.subr.mxu0 0.0
        %506 = vmatpush1.msra.mxu0 0.0
        %507 = vmatprep.subr.mxu0 0.0
        %508 = vmatpush1.msra.mxu0 0.0
        %509 = vmatprep.subr.mxu0 0.0
        %510 = vmatpush1.msra.mxu0 0.0
        %511 = vmatprep.subr.mxu0 0.0
        %512 = vmatpush1.msra.mxu0 0.0
        %513 = vmatprep.subr.mxu0 0.0
        %514 = vmatpush1.msra.mxu0 0.0
        %515 = vmatprep.subr.mxu0 0.0
        %516 = vmatpush1.msra.mxu0 0.0
        %517 = vmatprep.subr.mxu0 0.0
        %518 = vmatpush1.msra.mxu0 0.0
        %519 = vmatprep.subr.mxu0 0.0
        %520 = vmatpush1.msra.mxu0 0.0
        %521 = vmatprep.subr.mxu0 0.0
        %522 = vmatpush1.msra.mxu0 0.0
        %523 = vmatprep.subr.mxu0 0.0
        %524 = vmatpush1.msra.mxu0 0.0
        %525 = vmatprep.subr.mxu0 0.0
        %526 = vmatpush1.msra.mxu0 0.0
        %527 = vmatprep.subr.mxu0 0.0
        %528 = vmatpush1.msra.mxu0 0.0
        %529 = vmatprep.subr.mxu0 0.0
        %530 = vmatpush1.msra.mxu0 0.0
        %531 = vmatprep.subr.mxu0 0.0
        %532 = vmatpush1.msra.mxu0 0.0
        %533 = vmatprep.subr.mxu0 0.0
        %534 = vmatpush1.msra.mxu0 0.0
        %535 = vmatprep.subr.mxu0 0.0
        %536 = vmatpush1.msra.mxu0 0.0
        %537 = vmatprep.subr.mxu0 0.0
        %538 = vmatpush1.msra.mxu0 0.0
        %539 = vmatprep.subr.mxu0 0.0
        %540 = vmatpush1.msra.mxu0 0.0
        %541 = vmatprep.subr.mxu0 0.0
        %542 = vmatpush1.msra.mxu0 0.0
        %543 = vmatprep.subr.mxu0 0.0
        %544 = vmatpush1.msra.mxu0 0.0
        %545 = vmatprep.subr.mxu0 0.0
        %546 = vmatpush1.msra.mxu0 0.0
        %547 = vmatprep.subr.mxu0 0.0
        %548 = vmatpush1.msra.mxu0 0.0
        %549 = vmatprep.subr.mxu0 0.0
        %550 = vmatpush1.msra.mxu0 0.0
        %551 = vmatprep.subr.mxu0 0.0
        %552 = vmatpush1.msra.mxu0 0.0
        %553 = vmatprep.mubr.f32.mxu0 0.0
        %554 = vmatmul.mubr.f32.gmra.mrb[0].mxu0 %v390
        %v555 = vpop.f32.mrb[0].mxu0
        %v556 = vadd.f32 %v319, %v555
        %v557 = vpop.f32.mrb[0].mxu0
        %558 = vmatprep.mubr.f32.mxu0 0.0
        %559 = vmatmul.mubr.f32.gmra.mrb[0].mxu0 %v393
        %v560 = vpop.f32.mrb[0].mxu0
        %v561 = vadd.f32 %v319, %v560
        %v562 = vpop.f32.mrb[0].mxu0
        %563 = vmatprep.mubr.f32.mxu0 0.0
        %564 = vmatmul.mubr.f32.gmra.mrb[0].mxu0 %v396
        %v565 = vpop.f32.mrb[0].mxu0
        %v566 = vadd.f32 %v319, %v565
        %v567 = vpop.f32.mrb[0].mxu0
        %568 = vmatprep.mubr.f32.mxu0 0.0
        %569 = vmatmul.mubr.f32.gmra.mrb[0].mxu0 %v399
        %v570 = vpop.f32.mrb[0].mxu0
        %v571 = vadd.f32 %v319, %v570
        %v572 = vpop.f32.mrb[0].mxu0
        %573 = vmatprep.mubr.f32.mxu0 0.0
        %574 = vmatmul.mubr.f32.gmra.mrb[0].mxu0 %v402
        %v575 = vpop.f32.mrb[0].mxu0
        %v576 = vadd.f32 %v319, %v575
        %v577 = vpop.f32.mrb[0].mxu0
        %578 = vmatprep.mubr.f32.mxu0 0.0
        %579 = vmatmul.mubr.f32.gmra.mrb[0].mxu0 %v405
        %v580 = vpop.f32.mrb[0].mxu0
        %v581 = vadd.f32 %v319, %v580
        %v582 = vpop.f32.mrb[0].mxu0
        %583 = vmatprep.mubr.f32.mxu0 0.0
        %584 = vmatmul.mubr.f32.gmra.mrb[0].mxu0 %v408
        %v585 = vpop.f32.mrb[0].mxu0
        %v586 = vadd.f32 %v319, %v585
        %v587 = vpop.f32.mrb[0].mxu0
        %588 = vmatprep.mubr.f32.mxu0 0.0
        %589 = vmatmul.mubr.f32.gmra.mrb[0].mxu0 %v411
        %v590 = vpop.f32.mrb[0].mxu0
        %v591 = vadd.f32 %v319, %v590
        %v592 = vpop.f32.mrb[0].mxu0
        %593 = vmatprep.mubr.f32.mxu0 0.0
        %594 = vmatmul.mubr.f32.gmra.mrb[0].mxu0 %v414
        %v595 = vpop.f32.mrb[0].mxu0
        %v596 = vadd.f32 %v319, %v595
        %v597 = vpop.f32.mrb[0].mxu0
        %598 = vmatprep.mubr.f32.mxu0 0.0
        %599 = vmatmul.mubr.f32.gmra.mrb[0].mxu0 %v417
        %v600 = vpop.f32.mrb[0].mxu0
        %v601 = vadd.f32 %v319, %v600
        %v602 = vpop.f32.mrb[0].mxu0
        %603 = vmatprep.mubr.f32.mxu0 0.0
        %604 = vmatmul.mubr.f32.gmra.mrb[0].mxu0 %v420
        %v605 = vpop.f32.mrb[0].mxu0
        %v606 = vadd.f32 %v319, %v605
        %v607 = vpop.f32.mrb[0].mxu0
        %608 = vmatprep.mubr.f32.mxu0 0.0
        %609 = vmatmul.mubr.f32.gmra.mrb[0].mxu0 %v423
        %v610 = vpop.f32.mrb[0].mxu0
        %v611 = vadd.f32 %v319, %v610
        %v612 = vpop.f32.mrb[0].mxu0
        %613 = vmatprep.mubr.f32.mxu0 0.0
        %614 = vmatmul.mubr.f32.gmra.mrb[0].mxu0 %v426
        %v615 = vpop.f32.mrb[0].mxu0
        %v616 = vadd.f32 %v319, %v615
        %v617 = vpop.f32.mrb[0].mxu0
        %618 = vmatprep.mubr.f32.mxu0 0.0
        %619 = vmatmul.mubr.f32.gmra.mrb[0].mxu0 %v429
        %v620 = vpop.f32.mrb[0].mxu0
        %v621 = vadd.f32 %v319, %v620
        %v622 = vpop.f32.mrb[0].mxu0
        %623 = vmatprep.mubr.f32.mxu0 0.0
        %624 = vmatmul.mubr.f32.gmra.mrb[0].mxu0 %v432
        %v625 = vpop.f32.mrb[0].mxu0
        %v626 = vadd.f32 %v319, %v625
        %v627 = vpop.f32.mrb[0].mxu0
        %628 = vmatprep.mubr.f32.mxu0 0.0
        %629 = vmatmul.mubr.f32.gmra.mrb[0].mxu0 %v435
        %v630 = vpop.f32.mrb[0].mxu0
        %v631 = vadd.f32 %v319, %v630
        %v632 = vpop.f32.mrb[0].mxu0
        %633 = vmatprep.mubr.f32.mxu0 0.0
        %634 = vmatmul.mubr.f32.gmra.mrb[0].mxu0 %v438
        %v635 = vpop.f32.mrb[0].mxu0
        %v636 = vadd.f32 %v319, %v635
        %v637 = vpop.f32.mrb[0].mxu0
        %638 = vmatprep.mubr.f32.mxu0 0.0
        %639 = vmatmul.mubr.f32.gmra.mrb[0].mxu0 %v441
        %v640 = vpop.f32.mrb[0].mxu0
        %v641 = vadd.f32 %v319, %v640
        %v642 = vpop.f32.mrb[0].mxu0
        %643 = vmatprep.mubr.f32.mxu0 0.0
        %644 = vmatmul.mubr.f32.gmra.mrb[0].mxu0 %v444
        %v645 = vpop.f32.mrb[0].mxu0
        %v646 = vadd.f32 %v319, %v645
        %v647 = vpop.f32.mrb[0].mxu0
        %648 = vmatprep.mubr.f32.mxu0 0.0
        %649 = vmatmul.mubr.f32.gmra.mrb[0].mxu0 %v447
        %v650 = vpop.f32.mrb[0].mxu0
        %v651 = vadd.f32 %v319, %v650
        %v652 = vpop.f32.mrb[0].mxu0
        %653 = vmatprep.mubr.f32.mxu0 0.0
        %654 = vmatmul.mubr.f32.gmra.mrb[0].mxu0 %v450
        %v655 = vpop.f32.mrb[0].mxu0
        %v656 = vadd.f32 %v319, %v655
        %v657 = vpop.f32.mrb[0].mxu0
        %658 = vmatprep.mubr.f32.mxu0 0.0
        %659 = vmatmul.mubr.f32.gmra.mrb[0].mxu0 %v453
        %v660 = vpop.f32.mrb[0].mxu0
        %v661 = vadd.f32 %v319, %v660
        %v662 = vpop.f32.mrb[0].mxu0
        %663 = vmatprep.mubr.f32.mxu0 0.0
        %664 = vmatmul.mubr.f32.gmra.mrb[0].mxu0 %v456
        %v665 = vpop.f32.mrb[0].mxu0
        %v666 = vadd.f32 %v319, %v665
        %v667 = vpop.f32.mrb[0].mxu0
        %668 = vmatprep.mubr.f32.mxu0 0.0
        %669 = vmatmul.mubr.f32.gmra.mrb[0].mxu0 %v459
        %v670 = vpop.f32.mrb[0].mxu0
        %v671 = vadd.f32 %v319, %v670
        %v672 = vpop.f32.mrb[0].mxu0
        %673 = vmatprep.mubr.f32.mxu0 0.0
        %674 = vmatmul.mubr.f32.gmra.mrb[0].mxu0 %v462
        %v675 = vpop.f32.mrb[0].mxu0
        %v676 = vadd.f32 %v319, %v675
        %v677 = vpop.f32.mrb[0].mxu0
        %678 = vmatprep.mubr.f32.mxu0 0.0
        %679 = vmatmul.mubr.f32.gmra.mrb[0].mxu0 %v465
        %v680 = vpop.f32.mrb[0].mxu0
        %v681 = vadd.f32 %v319, %v680
        %v682 = vpop.f32.mrb[0].mxu0
        %683 = vmatprep.mubr.f32.mxu0 0.0
        %684 = vmatmul.mubr.f32.gmra.mrb[0].mxu0 %v468
        %v685 = vpop.f32.mrb[0].mxu0
        %v686 = vadd.f32 %v319, %v685
        %v687 = vpop.f32.mrb[0].mxu0
        %688 = vmatprep.mubr.f32.mxu0 0.0
        %689 = vmatmul.mubr.f32.gmra.mrb[0].mxu0 %v471
        %v690 = vpop.f32.mrb[0].mxu0
        %v691 = vadd.f32 %v319, %v690
        %v692 = vpop.f32.mrb[0].mxu0
        %693 = vmatprep.mubr.f32.mxu0 0.0
        %694 = vmatmul.mubr.f32.gmra.mrb[0].mxu0 %v474
        %v695 = vpop.f32.mrb[0].mxu0
        %v696 = vadd.f32 %v319, %v695
        %v697 = vpop.f32.mrb[0].mxu0
        %698 = vmatprep.mubr.f32.mxu0 0.0
        %699 = vmatmul.mubr.f32.gmra.mrb[0].mxu0 %v477
        %v700 = vpop.f32.mrb[0].mxu0
        %v701 = vadd.f32 %v319, %v700
        %v702 = vpop.f32.mrb[0].mxu0
        %703 = vmatprep.mubr.f32.mxu0 0.0
        %704 = vmatmul.mubr.f32.gmra.mrb[0].mxu0 %v480
        %v705 = vpop.f32.mrb[0].mxu0
        %v706 = vadd.f32 %v319, %v705
        %v707 = vpop.f32.mrb[0].mxu0
        %708 = vmatprep.mubr.f32.mxu0 0.0
        %709 = vmatmul.mubr.f32.gmra.mrb[0].mxu0 %v483
        %v710 = vpop.f32.mrb[0].mxu0
        %v711 = vadd.f32 %v319, %v710
        %v712 = vpop.f32.mrb[0].mxu0
        %713 = vdwg.mxu0
        %v714 = vld [vmem:[%s2] sm:$0xf]
        %v715 = vld [vmem:[%s4] sm:$0xf]
        %717 = vset.pattern.permute.xlu0 0
        %718 = vperm.xlu0 %717, %v715
        %v719 = vpop.permute.xlu0 %718
        %721 = vxpose.xlu0.b32.start [1/16] %v714, 128
        %722 = vxpose.xlu0.b32.cont [2/16] 0.0, 128
        %723 = vxpose.xlu0.b32.cont [3/16] 0.0, 128
        %724 = vxpose.xlu0.b32.cont [4/16] 0.0, 128
        %725 = vxpose.xlu0.b32.cont [5/16] 0.0, 128
        %726 = vxpose.xlu0.b32.cont [6/16] 0.0, 128
        %727 = vxpose.xlu0.b32.cont [7/16] 0.0, 128
        %728 = vxpose.xlu0.b32.cont [8/16] 0.0, 128
        %729 = vxpose.xlu0.b32.cont [9/16] 0.0, 128
        %730 = vxpose.xlu0.b32.cont [10/16] 0.0, 128
        %731 = vxpose.xlu0.b32.cont [11/16] 0.0, 128
        %732 = vxpose.xlu0.b32.cont [12/16] 0.0, 128
        %733 = vxpose.xlu0.b32.cont [13/16] 0.0, 128
        %734 = vxpose.xlu0.b32.cont [14/16] 0.0, 128
        %735 = vxpose.xlu0.b32.cont [15/16] 0.0, 128
        %736 = vxpose.xlu0.b32.end [16/16] 0.0, 128
        %v737 = vpop.trf.xlu0
        %v738 = vpop.trf.xlu0
        %v739 = vpop.trf.xlu0
        %v740 = vpop.trf.xlu0
        %v741 = vpop.trf.xlu0
        %v742 = vpop.trf.xlu0
        %v743 = vpop.trf.xlu0
        %v744 = vpop.trf.xlu0
        %v745 = vpop.trf.xlu0
        %v746 = vpop.trf.xlu0
        %v747 = vpop.trf.xlu0
        %v748 = vpop.trf.xlu0
        %v749 = vpop.trf.xlu0
        %v750 = vpop.trf.xlu0
        %v751 = vpop.trf.xlu0
        %v752 = vpop.trf.xlu0
        %v754 = vsel %vm388, %v737, 0
        %v756 = vsel %vm485, %v312, 0
        %v758 = vsel %vm485, %v322, 0
        %760 = vmatprep.subr.mxu0 %v758
        %761 = vmatpush1.msra.mxu0 %v756
        %762 = vmatprep.subr.mxu0 0.0
        %763 = vmatpush1.msra.mxu0 0.0
        %764 = vmatprep.subr.mxu0 0.0
        %765 = vmatpush1.msra.mxu0 0.0
        %766 = vmatprep.subr.mxu0 0.0
        %767 = vmatpush1.msra.mxu0 0.0
        %768 = vmatprep.subr.mxu0 0.0
        %769 = vmatpush1.msra.mxu0 0.0
        %770 = vmatprep.subr.mxu0 0.0
        %771 = vmatpush1.msra.mxu0 0.0
        %772 = vmatprep.subr.mxu0 0.0
        %773 = vmatpush1.msra.mxu0 0.0
        %774 = vmatprep.subr.mxu0 0.0
        %775 = vmatpush1.msra.mxu0 0.0
        %776 = vmatprep.subr.mxu0 0.0
        %777 = vmatpush1.msra.mxu0 0.0
        %778 = vmatprep.subr.mxu0 0.0
        %779 = vmatpush1.msra.mxu0 0.0
        %780 = vmatprep.subr.mxu0 0.0
        %781 = vmatpush1.msra.mxu0 0.0
        %782 = vmatprep.subr.mxu0 0.0
        %783 = vmatpush1.msra.mxu0 0.0
        %784 = vmatprep.subr.mxu0 0.0
        %785 = vmatpush1.msra.mxu0 0.0
        %786 = vmatprep.subr.mxu0 0.0
        %787 = vmatpush1.msra.mxu0 0.0
        %788 = vmatprep.subr.mxu0 0.0
        %789 = vmatpush1.msra.mxu0 0.0
        %790 = vmatprep.subr.mxu0 0.0
        %791 = vmatpush1.msra.mxu0 0.0
        %792 = vmatprep.subr.mxu0 0.0
        %793 = vmatpush1.msra.mxu0 0.0
        %794 = vmatprep.subr.mxu0 0.0
        %795 = vmatpush1.msra.mxu0 0.0
        %796 = vmatprep.subr.mxu0 0.0
        %797 = vmatpush1.msra.mxu0 0.0
        %798 = vmatprep.subr.mxu0 0.0
        %799 = vmatpush1.msra.mxu0 0.0
        %800 = vmatprep.subr.mxu0 0.0
        %801 = vmatpush1.msra.mxu0 0.0
        %802 = vmatprep.subr.mxu0 0.0
        %803 = vmatpush1.msra.mxu0 0.0
        %804 = vmatprep.subr.mxu0 0.0
        %805 = vmatpush1.msra.mxu0 0.0
        %806 = vmatprep.subr.mxu0 0.0
        %807 = vmatpush1.msra.mxu0 0.0
        %808 = vmatprep.subr.mxu0 0.0
        %809 = vmatpush1.msra.mxu0 0.0
        %810 = vmatprep.subr.mxu0 0.0
        %811 = vmatpush1.msra.mxu0 0.0
        %812 = vmatprep.subr.mxu0 0.0
        %813 = vmatpush1.msra.mxu0 0.0
        %814 = vmatprep.subr.mxu0 0.0
        %815 = vmatpush1.msra.mxu0 0.0
        %816 = vmatprep.subr.mxu0 0.0
        %817 = vmatpush1.msra.mxu0 0.0
        %818 = vmatprep.subr.mxu0 0.0
        %819 = vmatpush1.msra.mxu0 0.0
        %820 = vmatprep.subr.mxu0 0.0
        %821 = vmatpush1.msra.mxu0 0.0
        %822 = vmatprep.subr.mxu0 0.0
        %823 = vmatpush1.msra.mxu0 0.0
        %824 = vmatprep.mubr.f32.mxu0 0.0
        %825 = vmatmul.mubr.f32.gmra.mrb[0].mxu0 %v754
        %v826 = vpop.f32.mrb[0].mxu0
        %v827 = vadd.f32 %v719, %v826
        %v828 = vpop.f32.mrb[0].mxu0
        %v829 = vadd.f32 %v719, %v828
        %830 = vdwg.mxu0
        %v831 = vmul.f32 %v827, 0.5
        %v832 = vmul.f32 %v829, 0.5
        %v835 = vrot.slane %v831, 2
        %v836 = vrot.slane %v832, 2
        %v839 = vsub.f32 %v827, %v835
        %v840 = vsub.f32 %v829, %v836
        %v841 = vadd.f32 %v827, %v835
        %v842 = vadd.f32 %v829, %v836
        %v845 = vrot.slane %v841, 6
        %v846 = vrot.slane %v842, 6
        %vm849 = vcmask 1041408
        %v850 = vsel %vm849, %v839, %v845
        %v851 = vsel %vm849, %v840, %v846
        %v854 = vcombine.low %v850, %v851
        %856 = vst [vmem:[%s288] sm:$0xff] %v854
        %vm857 = vcmask 654336
        %858 = vst.msk [vmem:[%s310] sm:$0xff] %vm857, %v556
        %859 = vst.msk [vmem:[%s310 + $0x8] sm:$0xff] %vm857, %v561
        %860 = vst.msk [vmem:[%s310 + $0x10] sm:$0xff] %vm857, %v566
        %861 = vst.msk [vmem:[%s310 + $0x18] sm:$0xff] %vm857, %v571
        %862 = vst.msk [vmem:[%s310 + $0x20] sm:$0xff] %vm857, %v576
        %863 = vst.msk [vmem:[%s310 + $0x28] sm:$0xff] %vm857, %v581
        %864 = vst.msk [vmem:[%s310 + $0x30] sm:$0xff] %vm857, %v586
        %865 = vst.msk [vmem:[%s310 + $0x38] sm:$0xff] %vm857, %v591
        %866 = vst.msk [vmem:[%s310 + $0x40] sm:$0xff] %vm857, %v596
        %867 = vst.msk [vmem:[%s310 + $0x48] sm:$0xff] %vm857, %v601
        %868 = vst.msk [vmem:[%s310 + $0x50] sm:$0xff] %vm857, %v606
        %869 = vst.msk [vmem:[%s310 + $0x58] sm:$0xff] %vm857, %v611
        %870 = vst.msk [vmem:[%s310 + $0x60] sm:$0xff] %vm857, %v616
        %871 = vst.msk [vmem:[%s310 + $0x68] sm:$0xff] %vm857, %v621
        %872 = vst.msk [vmem:[%s310 + $0x70] sm:$0xff] %vm857, %v626
        %873 = vst.msk [vmem:[%s310 + $0x78] sm:$0xff] %vm857, %v631
        %874 = vst.msk [vmem:[%s310 + $0x80] sm:$0xff] %vm857, %v636
        %875 = vst.msk [vmem:[%s310 + $0x88] sm:$0xff] %vm857, %v641
        %876 = vst.msk [vmem:[%s310 + $0x90] sm:$0xff] %vm857, %v646
        %877 = vst.msk [vmem:[%s310 + $0x98] sm:$0xff] %vm857, %v651
        %878 = vst.msk [vmem:[%s310 + $0xa0] sm:$0xff] %vm857, %v656
        %879 = vst.msk [vmem:[%s310 + $0xa8] sm:$0xff] %vm857, %v661
        %880 = vst.msk [vmem:[%s310 + $0xb0] sm:$0xff] %vm857, %v666
        %881 = vst.msk [vmem:[%s310 + $0xb8] sm:$0xff] %vm857, %v671
        %882 = vst.msk [vmem:[%s310 + $0xc0] sm:$0xff] %vm857, %v676
        %883 = vst.msk [vmem:[%s310 + $0xc8] sm:$0xff] %vm857, %v681
        %884 = vst.msk [vmem:[%s310 + $0xd0] sm:$0xff] %vm857, %v686
        %885 = vst.msk [vmem:[%s310 + $0xd8] sm:$0xff] %vm857, %v691
        %886 = vst.msk [vmem:[%s310 + $0xe0] sm:$0xff] %vm857, %v696
        %887 = vst.msk [vmem:[%s310 + $0xe8] sm:$0xff] %vm857, %v701
        %888 = vst.msk [vmem:[%s310 + $0xf0] sm:$0xff] %vm857, %v706
        %889 = vst.msk [vmem:[%s310 + $0xf8] sm:$0xff] %vm857, %v711
        %s890 = sand.u32 %s158, 1
        %s891 = scalar_lea.sflag [#allocation4], %s890
        %s892 = sand.u32 %s158, 1
        %s893 = smul.addr %s892, 8
        %s894 = scalar_lea.vmem [#allocation5], %s893
        %s895 = smul.u32 32, %s29
        %p896 = scmp.lt.s32.totalorder %s28, 1
        %s897 = scalar_select %p896, %s28, 1
        %p898 = scmp.lt.s32.totalorder %s895, 31
        %s899 = scalar_select %p898, %s895, 31
        %s900 = smul.addr %s897, 32
        %s901 = sadd.s32 %s899, %s900
        %s902 = smul.addr %s901, 8
        %s903 = scalar_lea.vmem %s6, %s902
        // Predicated region
        $region45: #{tpu_custom_call.1} parent=39 // pred_check
          %p904 = pneg %p168
        $region46: #{tpu_custom_call.1} parent=39 // pred_check_branch
          %906 = sbr.rel (%p904) target = $region48
        $region47: #{tpu_custom_call.1} parent=39 // pred_region
          %s907 = smul.u32 2, %s29
          %s909 = ssub.s32 128, 128
          %910 = vsyncadd %s891, %s909
          %s911 = smul.addr %s28, 2
          %s912 = sadd.s32 %s907, %s911
          %s913 = smul.addr %s912, 64
          %s914 = scalar_lea.hbm %s5, %s913
          %s916 = sshll.u32 %s894, 4
          %s917 = int_to_ptr.vmem [resolvable:$true] %s916
          %919 = dma.vmem_to_hbm [thread:$0]  %s917, 128, %s914, %s891
        $region48: #{tpu_custom_call.1} parent=39 // pred_fallthru
          _
        // Predicated region
        $region49: #{tpu_custom_call.1} parent=39 // pred_check
          %p920 = pneg %p196
        $region50: #{tpu_custom_call.1} parent=39 // pred_check_branch
          %922 = sbr.rel (%p920) target = $region52
        $region51: #{tpu_custom_call.1} parent=39 // pred_region
          %s923 = smul.u32 32, %s29
        $region52: #{tpu_custom_call.1} parent=39 // pred_fallthru
          _
      $region40: #{tpu_custom_call.1} parent=5 // pred_fallthru
        _
      %p924 = scmp.le.s32.totalorder 2, %s19
      // Predicated region
      $region53: #{tpu_custom_call.1} parent=5 // pred_check
        %p925 = pneg %p924
      $region54: #{tpu_custom_call.1} parent=5 // pred_check_branch
        %927 = sbr.rel (%p925) target = $region56
      $region55: #{tpu_custom_call.1} parent=5 // pred_region
        %s928 = ssub.s32 %s19, 2
        // Predicated region
        $region57: #{tpu_custom_call.1} parent=55 // pred_check
          %p929 = pneg %p174
        $region58: #{tpu_custom_call.1} parent=55 // pred_check_branch
          %931 = sbr.rel (%p929) target = $region60
        $region59: #{tpu_custom_call.1} parent=55 // pred_region
          %s932 = sand.u32 %s159, 1
          %s933 = scalar_lea.sflag [#allocation4], %s932
          %s934 = sand.u32 %s159, 1
          %s935 = smul.addr %s934, 8
          %s936 = scalar_lea.vmem [#allocation5], %s935
          %937 = dma.done %s933, 128
        $region60: #{tpu_custom_call.1} parent=55 // pred_fallthru
          _
        // Predicated region
        $region61: #{tpu_custom_call.1} parent=55 // pred_check
          %p938 = pneg %p202
        $region62: #{tpu_custom_call.1} parent=55 // pred_check_branch
          %940 = sbr.rel (%p938) target = $region64
        $region63: #{tpu_custom_call.1} parent=55 // pred_region
          %s941 = smul.u32 32, %s31
          %p942 = scmp.lt.s32.totalorder %s30, 1
          %s943 = scalar_select %p942, %s30, 1
          %p944 = scmp.lt.s32.totalorder %s941, 31
          %s945 = scalar_select %p944, %s941, 31
          %s946 = smul.addr %s943, 32
          %s947 = sadd.s32 %s945, %s946
          %s948 = smul.addr %s947, 8
          %s949 = scalar_lea.vmem %s6, %s948
        $region64: #{tpu_custom_call.1} parent=55 // pred_fallthru
          _
      $region56: #{tpu_custom_call.1} parent=5 // pred_fallthru
        _
    $region6: #{tpu_custom_call.1} parent=1 // loop_footer
      %s23 = sadd.s32 1, %s19
    $region7: #{tpu_custom_call.1} parent=1 // loop_footer_branch
      %18 = sbr.rel target = $region3
    $region8: #{tpu_custom_call.1} parent=1 // loop_exit
      _
    %950 = vsyncpa [#allocation3], 1
    %s951 = scalar_lea.sflag [#allocation3], 1
    %952 = vsyncpa %s951, 1
    %953 = vsyncpa [#allocation4], 1
    %s954 = scalar_lea.sflag [#allocation4], 1
    %955 = vsyncpa %s954, 1

</llo_original>
